<compile_context>
chip_gen: v7x
topology: tpu7x:2x2x1
jax: 0.10.0
libtpu: 0.0.40
codegen_flags: <defaults>
</compile_context>

<pallas_src>
import functools

import jax
import jax.numpy as jnp
from jax.experimental import pallas as pl
from jax.experimental.pallas import tpu as pltpu


def _pick_tile(n, cap, step):
    """Largest tile <= cap that divides n and is a multiple of `step`.

    Falls back to the full extent (always a legal BlockSpec block)."""
    if n <= cap:
        return n
    t = (cap // step) * step
    while t >= step:
        if n % t == 0:
            return t
        t -= step
    return n


# ----------------------------------------------------------------------------
# Pass 1: K / V projections, written in head-major (pre-transposed) layouts.
# ----------------------------------------------------------------------------
def _kv_proj_kernel(n_heads, dk, dv, compute_dtype,
                    k_ref, v_ref, wk_ref, bk_ref, wv_ref, bv_ref,
                    kt_ref, vt_ref):
    t = k_ref.shape[1]
    kc = k_ref[0].astype(compute_dtype)
    vc = v_ref[0].astype(compute_dtype)
    kp = jnp.dot(kc, wk_ref[...], preferred_element_type=jnp.float32) + bk_ref[...]
    vp = jnp.dot(vc, wv_ref[...], preferred_element_type=jnp.float32) + bv_ref[...]
    # One 2-D transpose + major-dim-splitting reshape per KV tile; the flash
    # inner loop then consumes K^T / V^T with zero per-step relayout.
    kt_ref[0] = kp.T.reshape(n_heads, dk, t).astype(kt_ref.dtype)   # (H, dk, t)
    vt_ref[0] = vp.T.reshape(n_heads, dv, t).astype(vt_ref.dtype)   # (H, dv, t)


# ----------------------------------------------------------------------------
# Pass 2: flash-style multi-head attention with online softmax.
# ----------------------------------------------------------------------------
def _flash_mha_kernel(n_heads, dk, dv, scale, has_mask, compute_dtype, *refs):
    if has_mask:
        (q_ref, kt_ref, vt_ref, bias_ref, wq_ref, bq_ref,
         out_ref, qh_s, m_s, l_s, acc_s) = refs
    else:
        (q_ref, kt_ref, vt_ref, wq_ref, bq_ref,
         out_ref, qh_s, m_s, l_s, acc_s) = refs
        bias_ref = None

    kv = pl.program_id(2)
    tq = q_ref.shape[1]

    @pl.when(kv == 0)
    def _init():
        # Project Q once per (batch, q-tile); fold the softmax "scale"
        # (= 1/factor = sqrt(dk), reproducing `scores / dk**(-0.5)`) into Q.
        qp = jnp.dot(q_ref[0].astype(compute_dtype), wq_ref[...],
                     preferred_element_type=jnp.float32) + bq_ref[...]
        qp = qp * scale                                        # (tq, H*dk) f32
        qh_s[...] = (qp.reshape(tq, n_heads, dk)
                       .transpose(1, 0, 2)
                       .astype(compute_dtype))                 # (H, tq, dk)
        m_s[...] = jnp.full(m_s.shape, -jnp.inf, dtype=m_s.dtype)
        l_s[...] = jnp.zeros(l_s.shape, dtype=l_s.dtype)
        acc_s[...] = jnp.zeros(acc_s.shape, dtype=acc_s.dtype)

    # Batched QK^T over heads: (H, tq, dk) x (H, dk, tkv) -> (H, tq, tkv).
    s = jax.lax.dot_general(
        qh_s[...], kt_ref[0],
        dimension_numbers=(((2,), (1,)), ((0,), (0,))),
        preferred_element_type=jnp.float32)

    if bias_ref is not None:
        # Additive mask bias (0 / -1e9), broadcast over heads.
        s = s + bias_ref[0][None, :, :].astype(jnp.float32)

    # Online (flash) softmax update.
    m_prev = m_s[...]
    m_new = jnp.maximum(m_prev, jnp.max(s, axis=-1, keepdims=True))
    alpha = jnp.exp(m_prev - m_new)
    p = jnp.exp(s - m_new)
    l_s[...] = alpha * l_s[...] + jnp.sum(p, axis=-1, keepdims=True)
    # Batched P V over heads: (H, tq, tkv) x (H, dv, tkv) -> (H, tq, dv).
    acc_s[...] = alpha * acc_s[...] + jax.lax.dot_general(
        p.astype(compute_dtype), vt_ref[0],
        dimension_numbers=(((2,), (2,)), ((0,), (0,))),
        preferred_element_type=jnp.float32)
    m_s[...] = m_new

    @pl.when(kv == pl.num_programs(2) - 1)
    def _finalize():
        # Exact divide (not approx reciprocal) for parity with the reference.
        ctx = acc_s[...] / l_s[...]                            # (H, tq, dv) f32
        merged = ctx.transpose(1, 0, 2).reshape(tq, n_heads * dv)
        # Single lane-dense store: concat-heads + residual in one write.
        out_ref[0] = (merged + q_ref[0]).astype(out_ref.dtype)


def multi_head_attention(q, k, v, params, *, n_heads, dk, dv,
                         padding_mask=None, compute_dtype=jnp.bfloat16,
                         q_block=256, kv_block=512, vmem_limit_bytes=None):
    """params = (wq, bq, wk, bk, wv, bv); wq/wk: (d_model, H*dk), wv: (d_model, H*dv).

    Weights are stored as the transpose of torch nn.Linear.weight (y = x@W + b).
    compute_dtype is the MXU operand dtype (bf16 default: ~2x MXU throughput on
    v6e/v7x, native on v5e, half the DMA bytes); accumulation, softmax and the
    residual add stay float32.
    """
    wq, bq, wk, bk, wv, bv = params
    B, Sq, d_model = q.shape
    Sk = k.shape[1]
    assert k.shape[0] == B and v.shape[0] == B
    assert v.shape[1] == Sk, "attention requires seq_k == seq_v"
    assert n_heads * dv == d_model, "residual add requires n_heads*dv == d_model"

    # Tile caps sized for the smallest physical VMEM (v7x: 64 MiB); on v5e/v6e
    # they could be grown (and vmem_limit_bytes raised) for more HBM overlap.
    tq = _pick_tile(Sq, q_block, 8)
    tkv = _pick_tile(Sk, kv_block, 128)
    n_q = Sq // tq
    n_kv = Sk // tkv

    wq_c = wq.astype(compute_dtype)
    wk_c = wk.astype(compute_dtype)
    wv_c = wv.astype(compute_dtype)
    bq2 = bq.reshape(1, -1).astype(jnp.float32)
    bk2 = bk.reshape(1, -1).astype(jnp.float32)
    bv2 = bv.reshape(1, -1).astype(jnp.float32)
    k_c = k.astype(compute_dtype)
    v_c = v.astype(compute_dtype)

    cparams = pltpu.CompilerParams(
        dimension_semantics=("parallel", "parallel"),
        vmem_limit_bytes=vmem_limit_bytes)

    # ---------------- pass 1: K / V projections (head-major, transposed) -----
    kv_kernel = functools.partial(_kv_proj_kernel, n_heads, dk, dv, compute_dtype)
    kp_t, vp_t = pl.pallas_call(
        kv_kernel,
        out_shape=(jax.ShapeDtypeStruct((B, n_heads, dk, Sk), compute_dtype),
                   jax.ShapeDtypeStruct((B, n_heads, dv, Sk), compute_dtype)),
        grid=(B, n_kv),
        in_specs=[
            pl.BlockSpec((1, tkv, d_model), lambda b, j: (b, j, 0)),
            pl.BlockSpec((1, tkv, d_model), lambda b, j: (b, j, 0)),
            pl.BlockSpec((d_model, n_heads * dk), lambda b, j: (0, 0)),
            pl.BlockSpec((1, n_heads * dk), lambda b, j: (0, 0)),
            pl.BlockSpec((d_model, n_heads * dv), lambda b, j: (0, 0)),
            pl.BlockSpec((1, n_heads * dv), lambda b, j: (0, 0)),
        ],
        out_specs=(
            pl.BlockSpec((1, n_heads, dk, tkv), lambda b, j: (b, 0, 0, j)),
            pl.BlockSpec((1, n_heads, dv, tkv), lambda b, j: (b, 0, 0, j)),
        ),
        compiler_params=cparams,
    )(k_c, v_c, wk_c, bk2, wv_c, bv2)

    # ---------------- pass 2: flash attention --------------------------------
    has_mask = padding_mask is not None
    kernel = functools.partial(_flash_mha_kernel, n_heads, dk, dv,
                               float(dk) ** 0.5, has_mask, compute_dtype)

    in_specs = [
        pl.BlockSpec((1, tq, d_model), lambda b, i, j: (b, i, 0)),        # q/residual
        pl.BlockSpec((1, n_heads, dk, tkv), lambda b, i, j: (b, 0, 0, j)),  # K^T heads
        pl.BlockSpec((1, n_heads, dv, tkv), lambda b, i, j: (b, 0, 0, j)),  # V^T heads
    ]
    inputs = [q, kp_t, vp_t]
    if has_mask:
        # masked_fill(mask==0, -1e9) as an additive bias; compare hoisted to host.
        # (Matches masked_fill exactly unless a query row is *fully* masked.)
        attn_bias = jnp.where(padding_mask == 0, -1e9, 0.0).astype(compute_dtype)
        in_specs.append(pl.BlockSpec((1, tq, tkv), lambda b, i, j: (b, i, j)))
        inputs.append(attn_bias)
    # Weight/bias index_maps are constant -> fetched once across the grid.
    in_specs += [
        pl.BlockSpec((d_model, n_heads * dk), lambda b, i, j: (0, 0)),
        pl.BlockSpec((1, n_heads * dk), lambda b, i, j: (0, 0)),
    ]
    inputs += [wq_c, bq2]

    return pl.pallas_call(
        kernel,
        out_shape=jax.ShapeDtypeStruct((B, Sq, d_model), jnp.float32),
        grid=(B, n_q, n_kv),
        in_specs=in_specs,
        out_specs=pl.BlockSpec((1, tq, d_model), lambda b, i, j: (b, i, 0)),
        scratch_shapes=[
            pltpu.VMEM((n_heads, tq, dk), compute_dtype),   # scaled Q heads
            pltpu.VMEM((n_heads, tq, 1), jnp.float32),      # running max
            pltpu.VMEM((n_heads, tq, 1), jnp.float32),      # running sum
            pltpu.VMEM((n_heads, tq, dv), jnp.float32),     # f32 accumulator
        ],
        compiler_params=pltpu.CompilerParams(
            dimension_semantics=("parallel", "parallel", "arbitrary"),
            vmem_limit_bytes=vmem_limit_bytes),
    )(*inputs)


def _reference(q, k, v, params, n_heads, dk, dv, padding_mask=None):
    """Pure-JAX reference reproducing the torch forward (eval mode)."""
    wq, bq, wk, bk, wv, bv = params
    B, Sq, _ = q.shape
    qp = (q @ wq + bq).reshape(B, Sq, n_heads, dk).transpose(0, 2, 1, 3)
    kp = (k @ wk + bk).reshape(B, -1, n_heads, dk).transpose(0, 2, 1, 3)
    vp = (v @ wv + bv).reshape(B, -1, n_heads, dv).transpose(0, 2, 1, 3)
    s = jnp.einsum("bhqd,bhkd->bhqk", qp, kp) / (dk ** (-0.5))
    if padding_mask is not None:
        s = jnp.where(padding_mask[:, None, :, :] == 0, jnp.float32(-1e9), s)
    p = jax.nn.softmax(s, axis=-1)
    ctx = jnp.einsum("bhqk,bhkd->bhqd", p, vp)
    ctx = ctx.transpose(0, 2, 1, 3).reshape(B, Sq, n_heads * dv)
    return ctx + q


if __name__ == "__main__":
    # Small shapes consistent with the module: d_model = n_heads * dv.
    B, S, d_model = 2, 8, 32
    n_heads, dk, dv = 4, 8, 8

    key = jax.random.PRNGKey(0)
    kq, kk, kvv, kwq, kwk, kwv, kbq, kbk, kbv, km = jax.random.split(key, 10)

    q = jax.random.normal(kq, (B, S, d_model), jnp.float32)
    k = jax.random.normal(kk, (B, S, d_model), jnp.float32)
    v = jax.random.normal(kvv, (B, S, d_model), jnp.float32)

    wscale = 0.1
    params = (
        wscale * jax.random.normal(kwq, (d_model, n_heads * dk), jnp.float32),
        wscale * jax.random.normal(kbq, (n_heads * dk,), jnp.float32),
        wscale * jax.random.normal(kwk, (d_model, n_heads * dk), jnp.float32),
        wscale * jax.random.normal(kbk, (n_heads * dk,), jnp.float32),
        wscale * jax.random.normal(kwv, (d_model, n_heads * dv), jnp.float32),
        wscale * jax.random.normal(kbv, (n_heads * dv,), jnp.float32),
    )
    mask = (jax.random.uniform(km, (B, S, S)) > 0.2).astype(jnp.int32)
    # Keep at least one unmasked key per query row (additive-bias masking
    # matches masked_fill(-1e9) exactly except in that degenerate case).
    mask = mask.at[:, :, 0].set(1)

    # Default TPU matmul precision rounds f32 operands to bf16 on the MXU for
    # both the kernel and the jnp reference, so a ~1e-2 tolerance is used for
    # the "f32" checks (real logic errors would be O(1), far above it).
    tol = dict(atol=2e-2, rtol=2e-2)

    ref = _reference(q, k, v, params, n_heads, dk, dv)

    # 1) float32 MXU-operand path, no mask.
    out = jax.block_until_ready(
        multi_head_attention(q, k, v, params, n_heads=n_heads, dk=dk, dv=dv,
                             compute_dtype=jnp.float32))
    assert out.shape == (B, S, d_model)
    assert jnp.allclose(out, ref, **tol), "f32 mismatch vs reference"

    # 2) float32 path, with padding mask.
    out_m = jax.block_until_ready(
        multi_head_attention(q, k, v, params, n_heads=n_heads, dk=dk, dv=dv,
                             padding_mask=mask, compute_dtype=jnp.float32))
    ref_m = _reference(q, k, v, params, n_heads, dk, dv, padding_mask=mask)
    assert jnp.allclose(out_m, ref_m, **tol), "masked mismatch vs reference"

    # 3) default bf16 MXU-operand path (f32 accumulation) — loose sanity bound.
    out_bf = jax.block_until_ready(
        multi_head_attention(q, k, v, params, n_heads=n_heads, dk=dk, dv=dv))
    assert jnp.allclose(out_bf, ref, atol=2e-1, rtol=5e-2), "bf16 sanity check failed"

    # 4) exercise the flash tiling (multiple q- and kv-tiles, online softmax).
    S2 = 256
    k2q, k2k, k2v, k2m = jax.random.split(jax.random.PRNGKey(1), 4)
    q2 = jax.random.normal(k2q, (1, S2, d_model), jnp.float32)
    k2 = jax.random.normal(k2k, (1, S2, d_model), jnp.float32)
    v2 = jax.random.normal(k2v, (1, S2, d_model), jnp.float32)
    mask2 = (jax.random.uniform(k2m, (1, S2, S2)) > 0.2).astype(jnp.int32)
    mask2 = mask2.at[:, :, 0].set(1)
    out2 = jax.block_until_ready(
        multi_head_attention(q2, k2, v2, params, n_heads=n_heads, dk=dk, dv=dv,
                             padding_mask=mask2, compute_dtype=jnp.float32,
                             q_block=128, kv_block=128))
    ref2 = _reference(q2, k2, v2, params, n_heads, dk, dv, padding_mask=mask2)
    assert jnp.allclose(out2, ref2, **tol), "tiled flash path mismatch vs reference"

    print("KERNEL_OK")
</pallas_src>

<mosaic_0001>
module attributes {stable_mosaic.version = 11 : i64} {
  func.func @_kv_proj_kernel(%arg0: i32, %arg1: i32, %arg2: memref<1x8x32xf32, #tpu.memory_space<vmem>>, %arg3: memref<1x8x32xf32, #tpu.memory_space<vmem>>, %arg4: memref<32x32xf32, #tpu.memory_space<vmem>>, %arg5: memref<1x32xf32, #tpu.memory_space<vmem>>, %arg6: memref<32x32xf32, #tpu.memory_space<vmem>>, %arg7: memref<1x32xf32, #tpu.memory_space<vmem>>, %arg8: memref<1x4x8x8xf32, #tpu.memory_space<vmem>>, %arg9: memref<1x4x8x8xf32, #tpu.memory_space<vmem>>) attributes {dimension_semantics = [#tpu.dimension_semantics<parallel>, #tpu.dimension_semantics<parallel>], iteration_bounds = array<i64: 2, 1>, scalar_prefetch = 0 : i64, scratch_operands = 0 : i64, tpu.core_type = #tpu.core_type<tc>, window_params = [{transform_indices = @transform_0, window_bounds = array<i64: 1, 8, 32>}, {transform_indices = @transform_1, window_bounds = array<i64: 1, 8, 32>}, {pipeline_mode = #tpu.pipeline_mode<synchronous>, transform_indices = @transform_2, window_bounds = array<i64: 32, 32>}, {pipeline_mode = #tpu.pipeline_mode<synchronous>, transform_indices = @transform_3, window_bounds = array<i64: 1, 32>}, {pipeline_mode = #tpu.pipeline_mode<synchronous>, transform_indices = @transform_4, window_bounds = array<i64: 32, 32>}, {pipeline_mode = #tpu.pipeline_mode<synchronous>, transform_indices = @transform_5, window_bounds = array<i64: 1, 32>}, {transform_indices = @transform_6, window_bounds = array<i64: 1, 4, 8, 8>}, {transform_indices = @transform_7, window_bounds = array<i64: 1, 4, 8, 8>}]} {
    %c0 = arith.constant 0 : index
    %c0_0 = arith.constant 0 : index
    %c0_1 = arith.constant 0 : index
    %0 = vector.load %arg2[%c0, %c0_0, %c0_1] : memref<1x8x32xf32, #tpu.memory_space<vmem>>, vector<1x8x32xf32>
    %1 = vector.shape_cast %0 : vector<1x8x32xf32> to vector<8x32xf32>
    %c0_2 = arith.constant 0 : index
    %c0_3 = arith.constant 0 : index
    %c0_4 = arith.constant 0 : index
    %2 = vector.load %arg3[%c0_2, %c0_3, %c0_4] : memref<1x8x32xf32, #tpu.memory_space<vmem>>, vector<1x8x32xf32>
    %3 = vector.shape_cast %2 : vector<1x8x32xf32> to vector<8x32xf32>
    %c0_5 = arith.constant 0 : index
    %c0_6 = arith.constant 0 : index
    %4 = vector.load %arg4[%c0_5, %c0_6] : memref<32x32xf32, #tpu.memory_space<vmem>>, vector<32x32xf32>
    %cst = arith.constant dense<0.000000e+00> : vector<8x32xf32>
    %5 = tpu.matmul %1, %4, %cst {dimension_numbers = #tpu.dot_dimension_numbers<[1], [0], [0], [1], [0, 0, 1, 1], [], []>} : vector<8x32xf32>, vector<32x32xf32>, vector<8x32xf32> -> vector<8x32xf32>
    %c0_7 = arith.constant 0 : index
    %c0_8 = arith.constant 0 : index
    %6 = vector.load %arg5[%c0_7, %c0_8] : memref<1x32xf32, #tpu.memory_space<vmem>>, vector<1x32xf32>
    %7 = vector.broadcast %6 : vector<1x32xf32> to vector<8x32xf32>
    %8 = arith.addf %5, %7 : vector<8x32xf32>
    %c0_9 = arith.constant 0 : index
    %c0_10 = arith.constant 0 : index
    %9 = vector.load %arg6[%c0_9, %c0_10] : memref<32x32xf32, #tpu.memory_space<vmem>>, vector<32x32xf32>
    %cst_11 = arith.constant dense<0.000000e+00> : vector<8x32xf32>
    %10 = tpu.matmul %3, %9, %cst_11 {dimension_numbers = #tpu.dot_dimension_numbers<[1], [0], [0], [1], [0, 0, 1, 1], [], []>} : vector<8x32xf32>, vector<32x32xf32>, vector<8x32xf32> -> vector<8x32xf32>
    %c0_12 = arith.constant 0 : index
    %c0_13 = arith.constant 0 : index
    %11 = vector.load %arg7[%c0_12, %c0_13] : memref<1x32xf32, #tpu.memory_space<vmem>>, vector<1x32xf32>
    %12 = vector.broadcast %11 : vector<1x32xf32> to vector<8x32xf32>
    %13 = arith.addf %10, %12 : vector<8x32xf32>
    %14 = tpu.transpose %8, [1, 0] : vector<8x32xf32> -> vector<32x8xf32>
    %15 = vector.shape_cast %14 : vector<32x8xf32> to vector<4x8x8xf32>
    %c0_14 = arith.constant 0 : index
    %c0_15 = arith.constant 0 : index
    %c0_16 = arith.constant 0 : index
    %c0_17 = arith.constant 0 : index
    %16 = vector.load %arg8[%c0_14, %c0_15, %c0_16, %c0_17] : memref<1x4x8x8xf32, #tpu.memory_space<vmem>>, vector<1x4x8x8xf32>
    %17 = vector.shape_cast %16 : vector<1x4x8x8xf32> to vector<4x8x8xf32>
    %18 = vector.shape_cast %15 : vector<4x8x8xf32> to vector<1x4x8x8xf32>
    tpu.vector_store %arg8[%c0_14, %c0_15, %c0_16, %c0_17], %18 {strides = array<i32>} : memref<1x4x8x8xf32, #tpu.memory_space<vmem>>, vector<1x4x8x8xf32>,
    %19 = tpu.transpose %13, [1, 0] : vector<8x32xf32> -> vector<32x8xf32>
    %20 = vector.shape_cast %19 : vector<32x8xf32> to vector<4x8x8xf32>
    %c0_18 = arith.constant 0 : index
    %c0_19 = arith.constant 0 : index
    %c0_20 = arith.constant 0 : index
    %c0_21 = arith.constant 0 : index
    %21 = vector.load %arg9[%c0_18, %c0_19, %c0_20, %c0_21] : memref<1x4x8x8xf32, #tpu.memory_space<vmem>>, vector<1x4x8x8xf32>
    %22 = vector.shape_cast %21 : vector<1x4x8x8xf32> to vector<4x8x8xf32>
    %23 = vector.shape_cast %20 : vector<4x8x8xf32> to vector<1x4x8x8xf32>
    tpu.vector_store %arg9[%c0_18, %c0_19, %c0_20, %c0_21], %23 {strides = array<i32>} : memref<1x4x8x8xf32, #tpu.memory_space<vmem>>, vector<1x4x8x8xf32>,
    return
  }
  func.func @transform_0(%arg0: i32, %arg1: i32) -> (i32, i32, i32) {
    %c0_i32 = arith.constant 0 : i32
    %c0_i32_0 = arith.constant 0 : i32
    return %arg0, %arg1, %c0_i32 : i32, i32, i32
  }
  func.func @transform_1(%arg0: i32, %arg1: i32) -> (i32, i32, i32) {
    %c0_i32 = arith.constant 0 : i32
    %c0_i32_0 = arith.constant 0 : i32
    return %arg0, %arg1, %c0_i32 : i32, i32, i32
  }
  func.func @transform_2(%arg0: i32, %arg1: i32) -> (i32, i32) {
    %c0_i32 = arith.constant 0 : i32
    %c0_i32_0 = arith.constant 0 : i32
    %c0_i32_1 = arith.constant 0 : i32
    return %c0_i32, %c0_i32_0 : i32, i32
  }
  func.func @transform_3(%arg0: i32, %arg1: i32) -> (i32, i32) {
    %c0_i32 = arith.constant 0 : i32
    %c0_i32_0 = arith.constant 0 : i32
    %c0_i32_1 = arith.constant 0 : i32
    return %c0_i32, %c0_i32_0 : i32, i32
  }
  func.func @transform_4(%arg0: i32, %arg1: i32) -> (i32, i32) {
    %c0_i32 = arith.constant 0 : i32
    %c0_i32_0 = arith.constant 0 : i32
    %c0_i32_1 = arith.constant 0 : i32
    return %c0_i32, %c0_i32_0 : i32, i32
  }
  func.func @transform_5(%arg0: i32, %arg1: i32) -> (i32, i32) {
    %c0_i32 = arith.constant 0 : i32
    %c0_i32_0 = arith.constant 0 : i32
    %c0_i32_1 = arith.constant 0 : i32
    return %c0_i32, %c0_i32_0 : i32, i32
  }
  func.func @transform_6(%arg0: i32, %arg1: i32) -> (i32, i32, i32, i32) {
    %c0_i32 = arith.constant 0 : i32
    %c0_i32_0 = arith.constant 0 : i32
    %c0_i32_1 = arith.constant 0 : i32
    return %arg0, %c0_i32, %c0_i32_0, %arg1 : i32, i32, i32, i32
  }
  func.func @transform_7(%arg0: i32, %arg1: i32) -> (i32, i32, i32, i32) {
    %c0_i32 = arith.constant 0 : i32
    %c0_i32_0 = arith.constant 0 : i32
    %c0_i32_1 = arith.constant 0 : i32
    return %arg0, %c0_i32, %c0_i32_0, %arg1 : i32, i32, i32, i32
  }
}

</mosaic_0001>

<llo_original>
// kernel: tpu_custom_call.1
$region0: #{tpu_custom_call.1}
  #allocation0 [shape = 'u32[]', space=smem, size = 0x4, offset = 0x4, fixed_abs, tag = 'smem constant byte address 0x4 - core index']
  #allocation1 [shape = 'u32[144,128]{1,0:T(1,128)}', space=vmem, size = 0x12000, scoped, tag = 'internal scratch']
  %s0 = inlined_call_operand.hbm [shape: f32[2,8,32], index: 0, kind: input, shape index: {}]
  %s1 = inlined_call_operand.hbm [shape: f32[2,8,32], index: 1, kind: input, shape index: {}]
  %s2 = inlined_call_operand.hbm [shape: f32[32,32], index: 2, kind: input, shape index: {}]
  %s3 = inlined_call_operand.vmem [shape: f32[1,32], index: 3, kind: input, shape index: {}]
  %s4 = inlined_call_operand.hbm [shape: f32[32,32], index: 4, kind: input, shape index: {}]
  %s5 = inlined_call_operand.vmem [shape: f32[1,32], index: 5, kind: input, shape index: {}]
  %s6 = inlined_call_operand.hbm [shape: f32[2,4,8,8], index: 6, kind: output, shape index: {0}]
  %s7 = inlined_call_operand.hbm [shape: f32[2,4,8,8], index: 7, kind: output, shape index: {1}]
  %8 = xla_tuple %s6, %s7
  %s9 = sld [smem:[#allocation0]]
  $region81: #{tpu_custom_call.1} parent=0
    _
  %s11 = ssub.s32 1, %s9
  %s12 = scalar_select 0, %s11, %s9
  $region1: #{tpu_custom_call.1} parent=0
    #allocation2 [shape = 'u8[8192]{0}', space=vmem, size = 0x2000, scoped, tag = 'input window, operand 0']
    #allocation3 [shape = 's32[2]{0}', space=sflag, size = 0x8, scoped, tag = 'scoped memory for tpu_custom_call.1']
    #allocation4 [shape = 's32[2]{0}', space=sflag, size = 0x8, scoped, tag = 'scoped memory for tpu_custom_call.1']
    #allocation5 [shape = 'u8[8192]{0}', space=vmem, size = 0x2000, scoped, tag = 'input window, operand 1']
    #allocation6 [shape = 's32[2]{0}', space=sflag, size = 0x8, scoped, tag = 'scoped memory for tpu_custom_call.1']
    #allocation7 [shape = 'u8[16384]{0}', space=vmem, size = 0x4000, scoped, tag = 'input window, operand 2, single buffered']
    #allocation8 [shape = 'u8[16384]{0}', space=vmem, size = 0x4000, scoped, tag = 'input window, operand 4, single buffered']
    #allocation9 [shape = 's32[1]{0}', space=sflag, size = 0x4, scoped, tag = 'scoped memory for tpu_custom_call.1']
    #allocation10 [shape = 'u8[32768]{0}', space=vmem, size = 0x8000, scoped, tag = 'output window, operand 0']
    #allocation11 [shape = 'u8[32768]{0}', space=vmem, size = 0x8000, scoped, tag = 'output window, operand 1']
    #allocation12 [shape = 's32[2]{0}', space=sflag, size = 0x8, scoped, tag = 'scoped memory for tpu_custom_call.1']
    %13 = vsyncpa [#allocation3], 0
    %s14 = scalar_lea.sflag [#allocation3], 1
    %15 = vsyncpa %s14, 0
    %16 = vsyncpa [#allocation6], 0
    %s17 = scalar_lea.sflag [#allocation6], 1
    %18 = vsyncpa %s17, 0
    %19 = vsyncpa [#allocation9], 0
    %20 = vsyncpa [#allocation4], 0
    %s21 = scalar_lea.sflag [#allocation4], 1
    %22 = vsyncpa %s21, 0
    %23 = vsyncpa [#allocation12], 0
    %s24 = scalar_lea.sflag [#allocation12], 1
    %25 = vsyncpa %s24, 0
    loop: start=0, step=1, limit=4
    $region2: #{tpu_custom_call.1} parent=1 // loop_pre_header
      _
    $region3: #{tpu_custom_call.1} parent=1 // loop_header
      %s27 = sphi 0, %s31
      %p28 = scmp.ge.s32.totalorder %s27, 4
      %s34 = sphi 0, %s46
      %s35 = sphi 0, %s42
      %s36 = sphi 0, %s34
      %s37 = sphi 0, %s35
      %s38 = sphi 0, %s36
      %s39 = sphi 0, %s37
      %s51 = sphi 0, %s53
      %s54 = sphi 0, %s51
      %s55 = sphi 0, %s54
      %s71 = sphi 0, %s55
      %s79 = sphi 0, %s81
      %s82 = sphi 0, %s79
      %s83 = sphi 0, %s82
      %s99 = sphi 0, %s83
      %s103 = sphi 0, %s103
      %s105 = sphi 0, %s103
      %s106 = sphi 0, %s105
      %s120 = sphi 0, %s106
      %s124 = sphi 0, %s124
      %s126 = sphi 0, %s124
      %s127 = sphi 0, %s126
      %s141 = sphi 0, %s127
      %s145 = sphi 0, %s145
      %s147 = sphi 0, %s145
      %s148 = sphi 0, %s147
      %s162 = sphi 0, %s148
      %s166 = sphi 0, %s166
      %s168 = sphi 0, %s166
      %s169 = sphi 0, %s168
      %s183 = sphi 0, %s169
      %s191 = sphi 0, %s193
      %s194 = sphi 0, %s191
      %s195 = sphi 0, %s194
      %s211 = sphi 0, %s195
      %s219 = sphi 0, %s221
      %s222 = sphi 0, %s219
      %s223 = sphi 0, %s222
      %s239 = sphi 0, %s223
    $region4: #{tpu_custom_call.1} parent=1 // loop_header_branch
      %30 = sbr.rel (%p28) target = $region8
    $region5: #{tpu_custom_call.1} parent=1 // loop_body
      %s32 = ssub.s32 %s27, 1
      %s33 = ssub.s32 %s27, 2
      %s40 = sadd.s32 1, %s35
      %p41 = scmp.ge.s32.totalorder %s40, 1
      %s42 = scalar_select %p41, 0, %s40
      %s43 = sadd.s32 1, %s34
      %s44 = scalar_select %p41, %s43, %s34
      %p45 = scmp.ge.s32.totalorder %s44, 2
      %s46 = scalar_select %p45, 0, %s44
      %s47 = ssub.s32 %s34, %s46
      %s48 = ssub.s32 %s35, %s42
      %s49 = sor.u32 %s47, %s48
      %p50 = scmp.eq.s32.totalorder %s49, 0
      %s52 = sadd.s32 %s51, 1
      %s53 = scalar_select %p50, %s51, %s52
      %p56 = pneg %p50
      %p57 = scmp.eq.s32.totalorder %s27, 1
      %p58 = por %p56, %p57
      %p59 = scmp.ne.s32.totalorder %s51, %s54
      %p60 = scmp.eq.s32.totalorder %s27, 0
      %p61 = por %p59, %p60
      %p62 = scmp.ne.s32.totalorder %s51, %s54
      %p63 = scmp.eq.s32.totalorder %s32, 1
      %p64 = por %p62, %p63
      %p65 = scmp.ne.s32.totalorder %s54, %s55
      %p66 = scmp.eq.s32.totalorder %s32, 0
      %p67 = por %p65, %p66
      %p68 = scmp.ne.s32.totalorder %s54, %s55
      %p69 = scmp.eq.s32.totalorder %s33, 1
      %p70 = por %p68, %p69
      %p72 = scmp.ne.s32.totalorder %s55, %s71
      %p73 = scmp.eq.s32.totalorder %s33, 0
      %p74 = por %p72, %p73
      %s75 = ssub.s32 %s34, %s46
      %s76 = ssub.s32 %s35, %s42
      %s77 = sor.u32 %s75, %s76
      %p78 = scmp.eq.s32.totalorder %s77, 0
      %s80 = sadd.s32 %s79, 1
      %s81 = scalar_select %p78, %s79, %s80
      %p84 = pneg %p78
      %p85 = scmp.eq.s32.totalorder %s27, 1
      %p86 = por %p84, %p85
      %p87 = scmp.ne.s32.totalorder %s79, %s82
      %p88 = scmp.eq.s32.totalorder %s27, 0
      %p89 = por %p87, %p88
      %p90 = scmp.ne.s32.totalorder %s79, %s82
      %p91 = scmp.eq.s32.totalorder %s32, 1
      %p92 = por %p90, %p91
      %p93 = scmp.ne.s32.totalorder %s82, %s83
      %p94 = scmp.eq.s32.totalorder %s32, 0
      %p95 = por %p93, %p94
      %p96 = scmp.ne.s32.totalorder %s82, %s83
      %p97 = scmp.eq.s32.totalorder %s33, 1
      %p98 = por %p96, %p97
      %p100 = scmp.ne.s32.totalorder %s83, %s99
      %p101 = scmp.eq.s32.totalorder %s33, 0
      %p102 = por %p100, %p101
      %s104 = sadd.s32 %s103, 1
      %p107 = scmp.eq.s32.totalorder %s27, 1
      %p108 = scmp.ne.s32.totalorder %s103, %s105
      %p109 = scmp.eq.s32.totalorder %s27, 0
      %p110 = por %p108, %p109
      %p111 = scmp.ne.s32.totalorder %s103, %s105
      %p112 = scmp.eq.s32.totalorder %s32, 1
      %p113 = por %p111, %p112
      %p114 = scmp.ne.s32.totalorder %s105, %s106
      %p115 = scmp.eq.s32.totalorder %s32, 0
      %p116 = por %p114, %p115
      %p117 = scmp.ne.s32.totalorder %s105, %s106
      %p118 = scmp.eq.s32.totalorder %s33, 1
      %p119 = por %p117, %p118
      %p121 = scmp.ne.s32.totalorder %s106, %s120
      %p122 = scmp.eq.s32.totalorder %s33, 0
      %p123 = por %p121, %p122
      %s125 = sadd.s32 %s124, 1
      %p128 = scmp.eq.s32.totalorder %s27, 1
      %p129 = scmp.ne.s32.totalorder %s124, %s126
      %p130 = scmp.eq.s32.totalorder %s27, 0
      %p131 = por %p129, %p130
      %p132 = scmp.ne.s32.totalorder %s124, %s126
      %p133 = scmp.eq.s32.totalorder %s32, 1
      %p134 = por %p132, %p133
      %p135 = scmp.ne.s32.totalorder %s126, %s127
      %p136 = scmp.eq.s32.totalorder %s32, 0
      %p137 = por %p135, %p136
      %p138 = scmp.ne.s32.totalorder %s126, %s127
      %p139 = scmp.eq.s32.totalorder %s33, 1
      %p140 = por %p138, %p139
      %p142 = scmp.ne.s32.totalorder %s127, %s141
      %p143 = scmp.eq.s32.totalorder %s33, 0
      %p144 = por %p142, %p143
      %s146 = sadd.s32 %s145, 1
      %p149 = scmp.eq.s32.totalorder %s27, 1
      %p150 = scmp.ne.s32.totalorder %s145, %s147
      %p151 = scmp.eq.s32.totalorder %s27, 0
      %p152 = por %p150, %p151
      %p153 = scmp.ne.s32.totalorder %s145, %s147
      %p154 = scmp.eq.s32.totalorder %s32, 1
      %p155 = por %p153, %p154
      %p156 = scmp.ne.s32.totalorder %s147, %s148
      %p157 = scmp.eq.s32.totalorder %s32, 0
      %p158 = por %p156, %p157
      %p159 = scmp.ne.s32.totalorder %s147, %s148
      %p160 = scmp.eq.s32.totalorder %s33, 1
      %p161 = por %p159, %p160
      %p163 = scmp.ne.s32.totalorder %s148, %s162
      %p164 = scmp.eq.s32.totalorder %s33, 0
      %p165 = por %p163, %p164
      %s167 = sadd.s32 %s166, 1
      %p170 = scmp.eq.s32.totalorder %s27, 1
      %p171 = scmp.ne.s32.totalorder %s166, %s168
      %p172 = scmp.eq.s32.totalorder %s27, 0
      %p173 = por %p171, %p172
      %p174 = scmp.ne.s32.totalorder %s166, %s168
      %p175 = scmp.eq.s32.totalorder %s32, 1
      %p176 = por %p174, %p175
      %p177 = scmp.ne.s32.totalorder %s168, %s169
      %p178 = scmp.eq.s32.totalorder %s32, 0
      %p179 = por %p177, %p178
      %p180 = scmp.ne.s32.totalorder %s168, %s169
      %p181 = scmp.eq.s32.totalorder %s33, 1
      %p182 = por %p180, %p181
      %p184 = scmp.ne.s32.totalorder %s169, %s183
      %p185 = scmp.eq.s32.totalorder %s33, 0
      %p186 = por %p184, %p185
      %s187 = ssub.s32 %s34, %s46
      %s188 = ssub.s32 %s35, %s42
      %s189 = sor.u32 %s187, %s188
      %p190 = scmp.eq.s32.totalorder %s189, 0
      %s192 = sadd.s32 %s191, 1
      %s193 = scalar_select %p190, %s191, %s192
      %p196 = pneg %p190
      %p197 = scmp.eq.s32.totalorder %s27, 1
      %p198 = por %p196, %p197
      %p199 = scmp.ne.s32.totalorder %s191, %s194
      %p200 = scmp.eq.s32.totalorder %s27, 0
      %p201 = por %p199, %p200
      %p202 = scmp.ne.s32.totalorder %s191, %s194
      %p203 = scmp.eq.s32.totalorder %s32, 1
      %p204 = por %p202, %p203
      %p205 = scmp.ne.s32.totalorder %s194, %s195
      %p206 = scmp.eq.s32.totalorder %s32, 0
      %p207 = por %p205, %p206
      %p208 = scmp.ne.s32.totalorder %s194, %s195
      %p209 = scmp.eq.s32.totalorder %s33, 1
      %p210 = por %p208, %p209
      %p212 = scmp.ne.s32.totalorder %s195, %s211
      %p213 = scmp.eq.s32.totalorder %s33, 0
      %p214 = por %p212, %p213
      %s215 = ssub.s32 %s34, %s46
      %s216 = ssub.s32 %s35, %s42
      %s217 = sor.u32 %s215, %s216
      %p218 = scmp.eq.s32.totalorder %s217, 0
      %s220 = sadd.s32 %s219, 1
      %s221 = scalar_select %p218, %s219, %s220
      %p224 = pneg %p218
      %p225 = scmp.eq.s32.totalorder %s27, 1
      %p226 = por %p224, %p225
      %p227 = scmp.ne.s32.totalorder %s219, %s222
      %p228 = scmp.eq.s32.totalorder %s27, 0
      %p229 = por %p227, %p228
      %p230 = scmp.ne.s32.totalorder %s219, %s222
      %p231 = scmp.eq.s32.totalorder %s32, 1
      %p232 = por %p230, %p231
      %p233 = scmp.ne.s32.totalorder %s222, %s223
      %p234 = scmp.eq.s32.totalorder %s32, 0
      %p235 = por %p233, %p234
      %p236 = scmp.ne.s32.totalorder %s222, %s223
      %p237 = scmp.eq.s32.totalorder %s33, 1
      %p238 = por %p236, %p237
      %p240 = scmp.ne.s32.totalorder %s223, %s239
      %p241 = scmp.eq.s32.totalorder %s33, 0
      %p242 = por %p240, %p241
      %p243 = scmp.le.s32.totalorder 1, %s27
      %p244 = scmp.lt.s32.totalorder %s27, 3
      %p245 = pnand %p243, %p244
      %p246 = pneg %p245
      // Predicated region
      $region9: #{tpu_custom_call.1} parent=5 // pred_check
        _
      $region10: #{tpu_custom_call.1} parent=5 // pred_check_branch
        %248 = sbr.rel (%p245) target = $region12
      $region11: #{tpu_custom_call.1} parent=5 // pred_region
        %s249 = ssub.s32 %s27, 1
        // Predicated region
        $region13: #{tpu_custom_call.1} parent=11 // pred_check
          %p250 = pneg %p116
        $region14: #{tpu_custom_call.1} parent=11 // pred_check_branch
          %252 = sbr.rel (%p250) target = $region16
        $region15: #{tpu_custom_call.1} parent=11 // pred_region
          %s254 = ssub.s32 512, 512
          %255 = vsyncadd [#allocation6], %s254
          %s256 = sshll.u32 [#allocation7], 4
          %s257 = int_to_ptr.vmem [resolvable:$true] %s256
          %262 = dma.hbm_to_vmem [thread:$0]  %s2, 512, %s257, [#allocation6], 128, 128, 8
        $region16: #{tpu_custom_call.1} parent=11 // pred_fallthru
          _
        // Predicated region
        $region17: #{tpu_custom_call.1} parent=11 // pred_check
          %p263 = pneg %p137
        $region18: #{tpu_custom_call.1} parent=11 // pred_check_branch
          %265 = sbr.rel (%p263) target = $region20
        $region19: #{tpu_custom_call.1} parent=11 // pred_region
          _
        $region20: #{tpu_custom_call.1} parent=11 // pred_fallthru
          _
        // Predicated region
        $region21: #{tpu_custom_call.1} parent=11 // pred_check
          %p266 = pneg %p158
        $region22: #{tpu_custom_call.1} parent=11 // pred_check_branch
          %268 = sbr.rel (%p266) target = $region24
        $region23: #{tpu_custom_call.1} parent=11 // pred_region
          %s270 = ssub.s32 512, 512
          %271 = vsyncadd [#allocation9], %s270
          %s272 = sshll.u32 [#allocation8], 4
          %s273 = int_to_ptr.vmem [resolvable:$true] %s272
          %278 = dma.hbm_to_vmem [thread:$0]  %s4, 512, %s273, [#allocation9], 128, 128, 8
        $region24: #{tpu_custom_call.1} parent=11 // pred_fallthru
          _
        // Predicated region
        $region25: #{tpu_custom_call.1} parent=11 // pred_check
          %p279 = pneg %p179
        $region26: #{tpu_custom_call.1} parent=11 // pred_check_branch
          %281 = sbr.rel (%p279) target = $region28
        $region27: #{tpu_custom_call.1} parent=11 // pred_region
          _
        $region28: #{tpu_custom_call.1} parent=11 // pred_fallthru
          _
      $region12: #{tpu_custom_call.1} parent=5 // pred_fallthru
        _
      %p282 = scmp.lt.s32.totalorder %s27, 2
      // Predicated region
      $region29: #{tpu_custom_call.1} parent=5 // pred_check
        %p283 = pneg %p282
      $region30: #{tpu_custom_call.1} parent=5 // pred_check_branch
        %285 = sbr.rel (%p283) target = $region32
      $region31: #{tpu_custom_call.1} parent=5 // pred_region
        // Predicated region
        $region33: #{tpu_custom_call.1} parent=31 // pred_check
          %p286 = pneg %p61
        $region34: #{tpu_custom_call.1} parent=31 // pred_check_branch
          %288 = sbr.rel (%p286) target = $region36
        $region35: #{tpu_custom_call.1} parent=31 // pred_region
          %s289 = sand.u32 %s51, 1
          %s290 = scalar_lea.sflag [#allocation3], %s289
          %s291 = sand.u32 %s51, 1
          %s292 = smul.addr %s291, 8
          %s293 = scalar_lea.vmem [#allocation2], %s292
          %s295 = ssub.s32 128, 128
          %296 = vsyncadd %s290, %s295
          %s297 = sadd.s32 %s35, %s34
          %s298 = smul.addr %s297, 128
          %s299 = scalar_lea.hbm %s0, %s298
          %s301 = sshll.u32 %s293, 4
          %s302 = int_to_ptr.vmem [resolvable:$true] %s301
          %304 = dma.hbm_to_vmem [thread:$0]  %s299, 128, %s302, %s290
        $region36: #{tpu_custom_call.1} parent=31 // pred_fallthru
          _
        // Predicated region
        $region37: #{tpu_custom_call.1} parent=31 // pred_check
          %p305 = pneg %p89
        $region38: #{tpu_custom_call.1} parent=31 // pred_check_branch
          %307 = sbr.rel (%p305) target = $region40
        $region39: #{tpu_custom_call.1} parent=31 // pred_region
          %s308 = sand.u32 %s27, 1
          %s309 = scalar_lea.sflag [#allocation6], %s308
          %s310 = sand.u32 %s79, 1
          %s311 = smul.addr %s310, 8
          %s312 = scalar_lea.vmem [#allocation5], %s311
          %s314 = ssub.s32 128, 128
          %315 = vsyncadd %s309, %s314
          %s316 = sadd.s32 %s35, %s34
          %s317 = smul.addr %s316, 128
          %s318 = scalar_lea.hbm %s1, %s317
          %s320 = sshll.u32 %s312, 4
          %s321 = int_to_ptr.vmem [resolvable:$true] %s320
          %323 = dma.hbm_to_vmem [thread:$0]  %s318, 128, %s321, %s309
        $region40: #{tpu_custom_call.1} parent=31 // pred_fallthru
          _
      $region32: #{tpu_custom_call.1} parent=5 // pred_fallthru
        _
      %p324 = scmp.le.s32.totalorder 1, %s27
      %p325 = scmp.lt.s32.totalorder %s27, 3
      %p326 = pnand %p324, %p325
      %p327 = pneg %p326
      // Predicated region
      $region41: #{tpu_custom_call.1} parent=5 // pred_check
        _
      $region42: #{tpu_custom_call.1} parent=5 // pred_check_branch
        %329 = sbr.rel (%p326) target = $region44
      $region43: #{tpu_custom_call.1} parent=5 // pred_region
        %s330 = ssub.s32 %s27, 1
        %s331 = sand.u32 %s54, 1
        %s332 = scalar_lea.sflag [#allocation3], %s331
        %s333 = sand.u32 %s54, 1
        %s334 = smul.addr %s333, 8
        %s335 = scalar_lea.vmem [#allocation2], %s334
        // Predicated region
        $region45: #{tpu_custom_call.1} parent=43 // pred_check
          %p336 = pneg %p67
        $region46: #{tpu_custom_call.1} parent=43 // pred_check_branch
          %338 = sbr.rel (%p336) target = $region48
        $region47: #{tpu_custom_call.1} parent=43 // pred_region
          %339 = dma.done %s332, 128
        $region48: #{tpu_custom_call.1} parent=43 // pred_fallthru
          _
        %s340 = sand.u32 %s32, 1
        %s341 = scalar_lea.sflag [#allocation6], %s340
        %s342 = sand.u32 %s82, 1
        %s343 = smul.addr %s342, 8
        %s344 = scalar_lea.vmem [#allocation5], %s343
        // Predicated region
        $region49: #{tpu_custom_call.1} parent=43 // pred_check
          %p345 = pneg %p95
        $region50: #{tpu_custom_call.1} parent=43 // pred_check_branch
          %347 = sbr.rel (%p345) target = $region52
        $region51: #{tpu_custom_call.1} parent=43 // pred_region
          %348 = dma.done %s341, 128
        $region52: #{tpu_custom_call.1} parent=43 // pred_fallthru
          _
        // Predicated region
        $region53: #{tpu_custom_call.1} parent=43 // pred_check
          %p349 = pneg %p116
        $region54: #{tpu_custom_call.1} parent=43 // pred_check_branch
          %351 = sbr.rel (%p349) target = $region56
        $region55: #{tpu_custom_call.1} parent=43 // pred_region
          %352 = dma.done [#allocation6], 512
        $region56: #{tpu_custom_call.1} parent=43 // pred_fallthru
          _
        // Predicated region
        $region57: #{tpu_custom_call.1} parent=43 // pred_check
          %p353 = pneg %p158
        $region58: #{tpu_custom_call.1} parent=43 // pred_check_branch
          %355 = sbr.rel (%p353) target = $region60
        $region59: #{tpu_custom_call.1} parent=43 // pred_region
          %356 = dma.done [#allocation9], 512
        $region60: #{tpu_custom_call.1} parent=43 // pred_fallthru
          _
        %s357 = sand.u32 %s54, 1
        %s358 = scalar_lea.sflag [#allocation3], %s357
        %s359 = sand.u32 %s54, 1
        %s360 = smul.addr %s359, 8
        %s361 = scalar_lea.vmem [#allocation2], %s360
        %p362 = pneg %p67
        %p363 = pneg %p64
        %s364 = sand.u32 %s32, 1
        %s365 = scalar_lea.sflag [#allocation6], %s364
        %s366 = sand.u32 %s82, 1
        %s367 = smul.addr %s366, 8
        %s368 = scalar_lea.vmem [#allocation5], %s367
        %p369 = pneg %p95
        %p370 = pneg %p92
        %p371 = pneg %p116
        %p372 = pneg %p113
        %p373 = pneg %p137
        %p374 = pneg %p134
        %p375 = pneg %p158
        %p376 = pneg %p155
        %p377 = pneg %p179
        %p378 = pneg %p176
        %p379 = pneg %p207
        %p380 = pneg %p204
        %s381 = sand.u32 %s194, 1
        %s382 = scalar_lea.sflag [#allocation4], %s381
        %s383 = sand.u32 %s194, 1
        %s384 = smul.addr %s383, 32
        %s385 = scalar_lea.vmem [#allocation10], %s384
        %p386 = pneg %p235
        %p387 = pneg %p232
        %s388 = sand.u32 %s222, 1
        %s389 = scalar_lea.sflag [#allocation12], %s388
        %s390 = sand.u32 %s222, 1
        %s391 = smul.addr %s390, 32
        %s392 = scalar_lea.vmem [#allocation11], %s391
        %v393 = vld [vmem:[%s335] sm:$0xff]
        %v394 = vld [vmem:[%s344] sm:$0xff]
        %v395 = vld [vmem:[#allocation7] sm:$0xff]
        %v396 = vld [vmem:[#allocation7 + $0x8] sm:$0xff]
        %v397 = vld [vmem:[#allocation7 + $0x10] sm:$0xff]
        %v398 = vld [vmem:[#allocation7 + $0x18] sm:$0xff]
        %v399 = vld [vmem:[%s3] sm:$0x1]
        %v401 = vlaneseq
        %v402 = vshrl.u32 %v401, 7
        %v403 = vsub.s32 0, %v402
        %v404 = vrot.slane %v399, %v403
        %vm406 = vcmask 261120
        %v408 = vsel %vm406, %v393, 0
        %410 = vmatprep.subr.mxu0 0.0
        %411 = vmatpush1.msra.mxu0 %v395
        %412 = vmatprep.subr.mxu0 0.0
        %413 = vmatpush1.msra.mxu0 %v396
        %414 = vmatprep.subr.mxu0 0.0
        %415 = vmatpush1.msra.mxu0 %v397
        %416 = vmatprep.subr.mxu0 0.0
        %417 = vmatpush1.msra.mxu0 %v398
        %418 = vmatprep.subr.mxu0 0.0
        %419 = vmatpush1.msra.mxu0 0.0
        %420 = vmatprep.subr.mxu0 0.0
        %421 = vmatpush1.msra.mxu0 0.0
        %422 = vmatprep.subr.mxu0 0.0
        %423 = vmatpush1.msra.mxu0 0.0
        %424 = vmatprep.subr.mxu0 0.0
        %425 = vmatpush1.msra.mxu0 0.0
        %426 = vmatprep.subr.mxu0 0.0
        %427 = vmatpush1.msra.mxu0 0.0
        %428 = vmatprep.subr.mxu0 0.0
        %429 = vmatpush1.msra.mxu0 0.0
        %430 = vmatprep.subr.mxu0 0.0
        %431 = vmatpush1.msra.mxu0 0.0
        %432 = vmatprep.subr.mxu0 0.0
        %433 = vmatpush1.msra.mxu0 0.0
        %434 = vmatprep.subr.mxu0 0.0
        %435 = vmatpush1.msra.mxu0 0.0
        %436 = vmatprep.subr.mxu0 0.0
        %437 = vmatpush1.msra.mxu0 0.0
        %438 = vmatprep.subr.mxu0 0.0
        %439 = vmatpush1.msra.mxu0 0.0
        %440 = vmatprep.subr.mxu0 0.0
        %441 = vmatpush1.msra.mxu0 0.0
        %442 = vmatprep.subr.mxu0 0.0
        %443 = vmatpush1.msra.mxu0 0.0
        %444 = vmatprep.subr.mxu0 0.0
        %445 = vmatpush1.msra.mxu0 0.0
        %446 = vmatprep.subr.mxu0 0.0
        %447 = vmatpush1.msra.mxu0 0.0
        %448 = vmatprep.subr.mxu0 0.0
        %449 = vmatpush1.msra.mxu0 0.0
        %450 = vmatprep.subr.mxu0 0.0
        %451 = vmatpush1.msra.mxu0 0.0
        %452 = vmatprep.subr.mxu0 0.0
        %453 = vmatpush1.msra.mxu0 0.0
        %454 = vmatprep.subr.mxu0 0.0
        %455 = vmatpush1.msra.mxu0 0.0
        %456 = vmatprep.subr.mxu0 0.0
        %457 = vmatpush1.msra.mxu0 0.0
        %458 = vmatprep.subr.mxu0 0.0
        %459 = vmatpush1.msra.mxu0 0.0
        %460 = vmatprep.subr.mxu0 0.0
        %461 = vmatpush1.msra.mxu0 0.0
        %462 = vmatprep.subr.mxu0 0.0
        %463 = vmatpush1.msra.mxu0 0.0
        %464 = vmatprep.subr.mxu0 0.0
        %465 = vmatpush1.msra.mxu0 0.0
        %466 = vmatprep.subr.mxu0 0.0
        %467 = vmatpush1.msra.mxu0 0.0
        %468 = vmatprep.subr.mxu0 0.0
        %469 = vmatpush1.msra.mxu0 0.0
        %470 = vmatprep.subr.mxu0 0.0
        %471 = vmatpush1.msra.mxu0 0.0
        %472 = vmatprep.subr.mxu0 0.0
        %473 = vmatpush1.msra.mxu0 0.0
        %474 = vmatprep.mubr.f32.mxu0 0.0
        %475 = vmatmul.mubr.f32.gmra.mrb[0].mxu0 %v408
        %v476 = vpop.f32.mrb[0].mxu0
        %v477 = vadd.f32 %v404, %v476
        %v478 = vpop.f32.mrb[0].mxu0
        %479 = vdwg.mxu0
        %v480 = vld [vmem:[#allocation8] sm:$0xff]
        %v481 = vld [vmem:[#allocation8 + $0x8] sm:$0xff]
        %v482 = vld [vmem:[#allocation8 + $0x10] sm:$0xff]
        %v483 = vld [vmem:[#allocation8 + $0x18] sm:$0xff]
        %v484 = vld [vmem:[%s5] sm:$0x1]
        %v486 = vlaneseq
        %v487 = vshrl.u32 %v486, 7
        %v488 = vsub.s32 0, %v487
        %v489 = vrot.slane %v484, %v488
        %v492 = vsel %vm406, %v394, 0
        %494 = vmatprep.subr.mxu0 0.0
        %495 = vmatpush1.msra.mxu0 %v480
        %496 = vmatprep.subr.mxu0 0.0
        %497 = vmatpush1.msra.mxu0 %v481
        %498 = vmatprep.subr.mxu0 0.0
        %499 = vmatpush1.msra.mxu0 %v482
        %500 = vmatprep.subr.mxu0 0.0
        %501 = vmatpush1.msra.mxu0 %v483
        %502 = vmatprep.subr.mxu0 0.0
        %503 = vmatpush1.msra.mxu0 0.0
        %504 = vmatprep.subr.mxu0 0.0
        %505 = vmatpush1.msra.mxu0 0.0
        %506 = vmatprep.subr.mxu0 0.0
        %507 = vmatpush1.msra.mxu0 0.0
        %508 = vmatprep.subr.mxu0 0.0
        %509 = vmatpush1.msra.mxu0 0.0
        %510 = vmatprep.subr.mxu0 0.0
        %511 = vmatpush1.msra.mxu0 0.0
        %512 = vmatprep.subr.mxu0 0.0
        %513 = vmatpush1.msra.mxu0 0.0
        %514 = vmatprep.subr.mxu0 0.0
        %515 = vmatpush1.msra.mxu0 0.0
        %516 = vmatprep.subr.mxu0 0.0
        %517 = vmatpush1.msra.mxu0 0.0
        %518 = vmatprep.subr.mxu0 0.0
        %519 = vmatpush1.msra.mxu0 0.0
        %520 = vmatprep.subr.mxu0 0.0
        %521 = vmatpush1.msra.mxu0 0.0
        %522 = vmatprep.subr.mxu0 0.0
        %523 = vmatpush1.msra.mxu0 0.0
        %524 = vmatprep.subr.mxu0 0.0
        %525 = vmatpush1.msra.mxu0 0.0
        %526 = vmatprep.subr.mxu0 0.0
        %527 = vmatpush1.msra.mxu0 0.0
        %528 = vmatprep.subr.mxu0 0.0
        %529 = vmatpush1.msra.mxu0 0.0
        %530 = vmatprep.subr.mxu0 0.0
        %531 = vmatpush1.msra.mxu0 0.0
        %532 = vmatprep.subr.mxu0 0.0
        %533 = vmatpush1.msra.mxu0 0.0
        %534 = vmatprep.subr.mxu0 0.0
        %535 = vmatpush1.msra.mxu0 0.0
        %536 = vmatprep.subr.mxu0 0.0
        %537 = vmatpush1.msra.mxu0 0.0
        %538 = vmatprep.subr.mxu0 0.0
        %539 = vmatpush1.msra.mxu0 0.0
        %540 = vmatprep.subr.mxu0 0.0
        %541 = vmatpush1.msra.mxu0 0.0
        %542 = vmatprep.subr.mxu0 0.0
        %543 = vmatpush1.msra.mxu0 0.0
        %544 = vmatprep.subr.mxu0 0.0
        %545 = vmatpush1.msra.mxu0 0.0
        %546 = vmatprep.subr.mxu0 0.0
        %547 = vmatpush1.msra.mxu0 0.0
        %548 = vmatprep.subr.mxu0 0.0
        %549 = vmatpush1.msra.mxu0 0.0
        %550 = vmatprep.subr.mxu0 0.0
        %551 = vmatpush1.msra.mxu0 0.0
        %552 = vmatprep.subr.mxu0 0.0
        %553 = vmatpush1.msra.mxu0 0.0
        %554 = vmatprep.subr.mxu0 0.0
        %555 = vmatpush1.msra.mxu0 0.0
        %556 = vmatprep.subr.mxu0 0.0
        %557 = vmatpush1.msra.mxu0 0.0
        %558 = vmatprep.mubr.f32.mxu0 0.0
        %559 = vmatmul.mubr.f32.gmra.mrb[0].mxu0 %v492
        %v560 = vpop.f32.mrb[0].mxu0
        %v561 = vadd.f32 %v489, %v560
        %v562 = vpop.f32.mrb[0].mxu0
        %563 = vdwg.mxu0
        %564 = vxpose.xlu0.b32.start [1/16] %v477, 128
        %565 = vxpose.xlu0.b32.cont [2/16] 0.0, 128
        %566 = vxpose.xlu0.b32.cont [3/16] 0.0, 128
        %567 = vxpose.xlu0.b32.cont [4/16] 0.0, 128
        %568 = vxpose.xlu0.b32.cont [5/16] 0.0, 128
        %569 = vxpose.xlu0.b32.cont [6/16] 0.0, 128
        %570 = vxpose.xlu0.b32.cont [7/16] 0.0, 128
        %571 = vxpose.xlu0.b32.cont [8/16] 0.0, 128
        %572 = vxpose.xlu0.b32.cont [9/16] 0.0, 128
        %573 = vxpose.xlu0.b32.cont [10/16] 0.0, 128
        %574 = vxpose.xlu0.b32.cont [11/16] 0.0, 128
        %575 = vxpose.xlu0.b32.cont [12/16] 0.0, 128
        %576 = vxpose.xlu0.b32.cont [13/16] 0.0, 128
        %577 = vxpose.xlu0.b32.cont [14/16] 0.0, 128
        %578 = vxpose.xlu0.b32.cont [15/16] 0.0, 128
        %579 = vxpose.xlu0.b32.end [16/16] 0.0, 128
        %v580 = vpop.trf.xlu0
        %v581 = vpop.trf.xlu0
        %v582 = vpop.trf.xlu0
        %v583 = vpop.trf.xlu0
        %v584 = vpop.trf.xlu0
        %v585 = vpop.trf.xlu0
        %v586 = vpop.trf.xlu0
        %v587 = vpop.trf.xlu0
        %v588 = vpop.trf.xlu0
        %v589 = vpop.trf.xlu0
        %v590 = vpop.trf.xlu0
        %v591 = vpop.trf.xlu0
        %v592 = vpop.trf.xlu0
        %v593 = vpop.trf.xlu0
        %v594 = vpop.trf.xlu0
        %v595 = vpop.trf.xlu0
        %vm596 = vcmask 64512
        %597 = vst.msk [vmem:[%s385] sm:$0xff] %vm596, %v580
        %598 = vst.msk [vmem:[%s385 + $0x8] sm:$0xff] %vm596, %v581
        %599 = vst.msk [vmem:[%s385 + $0x10] sm:$0xff] %vm596, %v582
        %600 = vst.msk [vmem:[%s385 + $0x18] sm:$0xff] %vm596, %v583
        %601 = vxpose.xlu0.b32.start [1/16] %v561, 128
        %602 = vxpose.xlu0.b32.cont [2/16] 0.0, 128
        %603 = vxpose.xlu0.b32.cont [3/16] 0.0, 128
        %604 = vxpose.xlu0.b32.cont [4/16] 0.0, 128
        %605 = vxpose.xlu0.b32.cont [5/16] 0.0, 128
        %606 = vxpose.xlu0.b32.cont [6/16] 0.0, 128
        %607 = vxpose.xlu0.b32.cont [7/16] 0.0, 128
        %608 = vxpose.xlu0.b32.cont [8/16] 0.0, 128
        %609 = vxpose.xlu0.b32.cont [9/16] 0.0, 128
        %610 = vxpose.xlu0.b32.cont [10/16] 0.0, 128
        %611 = vxpose.xlu0.b32.cont [11/16] 0.0, 128
        %612 = vxpose.xlu0.b32.cont [12/16] 0.0, 128
        %613 = vxpose.xlu0.b32.cont [13/16] 0.0, 128
        %614 = vxpose.xlu0.b32.cont [14/16] 0.0, 128
        %615 = vxpose.xlu0.b32.cont [15/16] 0.0, 128
        %616 = vxpose.xlu0.b32.end [16/16] 0.0, 128
        %v617 = vpop.trf.xlu0
        %v618 = vpop.trf.xlu0
        %v619 = vpop.trf.xlu0
        %v620 = vpop.trf.xlu0
        %v621 = vpop.trf.xlu0
        %v622 = vpop.trf.xlu0
        %v623 = vpop.trf.xlu0
        %v624 = vpop.trf.xlu0
        %v625 = vpop.trf.xlu0
        %v626 = vpop.trf.xlu0
        %v627 = vpop.trf.xlu0
        %v628 = vpop.trf.xlu0
        %v629 = vpop.trf.xlu0
        %v630 = vpop.trf.xlu0
        %v631 = vpop.trf.xlu0
        %v632 = vpop.trf.xlu0
        %633 = vst.msk [vmem:[%s392] sm:$0xff] %vm596, %v617
        %634 = vst.msk [vmem:[%s392 + $0x8] sm:$0xff] %vm596, %v618
        %635 = vst.msk [vmem:[%s392 + $0x10] sm:$0xff] %vm596, %v619
        %636 = vst.msk [vmem:[%s392 + $0x18] sm:$0xff] %vm596, %v620
        %s637 = sand.u32 %s194, 1
        %s638 = scalar_lea.sflag [#allocation4], %s637
        %s639 = sand.u32 %s194, 1
        %s640 = smul.addr %s639, 32
        %s641 = scalar_lea.vmem [#allocation10], %s640
        %s642 = sand.u32 %s222, 1
        %s643 = scalar_lea.sflag [#allocation12], %s642
        %s644 = sand.u32 %s222, 1
        %s645 = smul.addr %s644, 32
        %s646 = scalar_lea.vmem [#allocation11], %s645
        // Predicated region
        $region61: #{tpu_custom_call.1} parent=43 // pred_check
          %p647 = pneg %p204
        $region62: #{tpu_custom_call.1} parent=43 // pred_check_branch
          %649 = sbr.rel (%p647) target = $region64
        $region63: #{tpu_custom_call.1} parent=43 // pred_region
          %s651 = ssub.s32 512, 512
          %652 = vsyncadd %s638, %s651
          %s653 = smul.addr %s36, 4
          %s654 = sadd.s32 %s37, %s653
          %s655 = smul.addr %s654, 128
          %s656 = scalar_lea.hbm %s6, %s655
          %s657 = sshll.u32 %s641, 4
          %s658 = int_to_ptr.vmem [resolvable:$true] %s657
          %663 = dma.vmem_to_hbm [thread:$0]  %s658, 512, %s656, %s638, 128, 128, 8
        $region64: #{tpu_custom_call.1} parent=43 // pred_fallthru
          _
        // Predicated region
        $region65: #{tpu_custom_call.1} parent=43 // pred_check
          %p664 = pneg %p232
        $region66: #{tpu_custom_call.1} parent=43 // pred_check_branch
          %666 = sbr.rel (%p664) target = $region68
        $region67: #{tpu_custom_call.1} parent=43 // pred_region
          %s668 = ssub.s32 512, 512
          %669 = vsyncadd %s643, %s668
          %s670 = smul.addr %s36, 4
          %s671 = sadd.s32 %s37, %s670
          %s672 = smul.addr %s671, 128
          %s673 = scalar_lea.hbm %s7, %s672
          %s674 = sshll.u32 %s646, 4
          %s675 = int_to_ptr.vmem [resolvable:$true] %s674
          %680 = dma.vmem_to_hbm [thread:$0]  %s675, 512, %s673, %s643, 128, 128, 8
        $region68: #{tpu_custom_call.1} parent=43 // pred_fallthru
          _
      $region44: #{tpu_custom_call.1} parent=5 // pred_fallthru
        _
      %p681 = scmp.le.s32.totalorder 2, %s27
      // Predicated region
      $region69: #{tpu_custom_call.1} parent=5 // pred_check
        %p682 = pneg %p681
      $region70: #{tpu_custom_call.1} parent=5 // pred_check_branch
        %684 = sbr.rel (%p682) target = $region72
      $region71: #{tpu_custom_call.1} parent=5 // pred_region
        %s685 = ssub.s32 %s27, 2
        // Predicated region
        $region73: #{tpu_custom_call.1} parent=71 // pred_check
          %p686 = pneg %p210
        $region74: #{tpu_custom_call.1} parent=71 // pred_check_branch
          %688 = sbr.rel (%p686) target = $region76
        $region75: #{tpu_custom_call.1} parent=71 // pred_region
          %s689 = sand.u32 %s195, 1
          %s690 = scalar_lea.sflag [#allocation4], %s689
          %s691 = sand.u32 %s195, 1
          %s692 = smul.addr %s691, 32
          %s693 = scalar_lea.vmem [#allocation10], %s692
          %694 = dma.done %s690, 512
        $region76: #{tpu_custom_call.1} parent=71 // pred_fallthru
          _
        // Predicated region
        $region77: #{tpu_custom_call.1} parent=71 // pred_check
          %p695 = pneg %p238
        $region78: #{tpu_custom_call.1} parent=71 // pred_check_branch
          %697 = sbr.rel (%p695) target = $region80
        $region79: #{tpu_custom_call.1} parent=71 // pred_region
          %s698 = sand.u32 %s223, 1
          %s699 = scalar_lea.sflag [#allocation12], %s698
          %s700 = sand.u32 %s223, 1
          %s701 = smul.addr %s700, 32
          %s702 = scalar_lea.vmem [#allocation11], %s701
          %703 = dma.done %s699, 512
        $region80: #{tpu_custom_call.1} parent=71 // pred_fallthru
          _
      $region72: #{tpu_custom_call.1} parent=5 // pred_fallthru
        _
    $region6: #{tpu_custom_call.1} parent=1 // loop_footer
      %s31 = sadd.s32 1, %s27
    $region7: #{tpu_custom_call.1} parent=1 // loop_footer_branch
      %26 = sbr.rel target = $region3
    $region8: #{tpu_custom_call.1} parent=1 // loop_exit
      _
    %704 = vsyncpa [#allocation3], 1
    %s705 = scalar_lea.sflag [#allocation3], 1
    %706 = vsyncpa %s705, 1
    %707 = vsyncpa [#allocation6], 1
    %s708 = scalar_lea.sflag [#allocation6], 1
    %709 = vsyncpa %s708, 1
    %710 = vsyncpa [#allocation9], 1
    %711 = vsyncpa [#allocation4], 1
    %s712 = scalar_lea.sflag [#allocation4], 1
    %713 = vsyncpa %s712, 1
    %714 = vsyncpa [#allocation12], 1
    %s715 = scalar_lea.sflag [#allocation12], 1
    %716 = vsyncpa %s715, 1

</llo_original>
